<compile_context>
chip_gen: v5e
topology: v5e:2x2
jax: 0.10.0
libtpu: 0.0.40
codegen_flags: <defaults>
</compile_context>

<pallas_src>
import functools

import jax
import jax.numpy as jnp
from jax import lax
from jax.experimental import pallas as pl
from jax.experimental.pallas import tpu as pltpu


def _pick_tile(dim, preferred, quantum):
    """Largest tile <= preferred that divides `dim` and is a multiple of `quantum`;
    falls back to the full dim (always legal for a BlockSpec)."""
    best = None
    cand = quantum
    limit = min(dim, preferred)
    while cand <= limit:
        if dim % cand == 0:
            best = cand
        cand += quantum
    return best if best is not None else dim


# ---------------------------------------------------------------------------
# 1) Hoisted input projection:  (T*B, D) @ (D, 8H) + bias   (tiled P1+P3 matmul)
# ---------------------------------------------------------------------------
def _matmul_bias_kernel(a_ref, b_ref, bias_ref, o_ref, acc_ref):
    @pl.when(pl.program_id(2) == 0)
    def _zero():
        acc_ref[...] = jnp.zeros_like(acc_ref)

    acc_ref[...] += jnp.dot(a_ref[...], b_ref[...],
                            preferred_element_type=jnp.float32)

    @pl.when(pl.program_id(2) == pl.num_programs(2) - 1)
    def _store():
        o_ref[...] = (acc_ref[...] + bias_ref[...]).astype(o_ref.dtype)


def matmul_bias(a, b, bias, *, tm_pref=256, tn_pref=256, tk_pref=512):
    M, K = a.shape
    _, N = b.shape
    tm = _pick_tile(M, tm_pref, 8)
    tn = _pick_tile(N, tn_pref, 128)
    tk = _pick_tile(K, tk_pref, 128)
    grid = (M // tm, N // tn, K // tk)
    return pl.pallas_call(
        _matmul_bias_kernel,
        out_shape=jax.ShapeDtypeStruct((M, N), jnp.float32),
        grid=grid,
        in_specs=[pl.BlockSpec((tm, tk), lambda i, j, k: (i, k)),
                  pl.BlockSpec((tk, tn), lambda i, j, k: (k, j)),
                  pl.BlockSpec((1, tn), lambda i, j, k: (0, j))],
        out_specs=pl.BlockSpec((tm, tn), lambda i, j, k: (i, j)),
        scratch_shapes=[pltpu.VMEM((tm, tn), jnp.float32)],
        compiler_params=pltpu.CompilerParams(
            dimension_semantics=("parallel", "parallel", "arbitrary")),
    )(a, b, bias)


# ---------------------------------------------------------------------------
# 2) Fused fwd+bwd recurrence, streamed over time-chunks via the grid
# ---------------------------------------------------------------------------
def _bilstm_chunk_kernel(gxf_ref, gxb_ref, mf_ref, mb_ref, whf_ref, whb_ref,
                         of_ref, ob_ref, state_ref, *, hidden, chunk):
    """One time-chunk of both directions.

    gxf_ref/gxb_ref : (chunk, B, 4H)  precomputed x@W_ih + bias (fwd / bwd gates)
    mf_ref/mb_ref   : (chunk, B, 1)   validity mask (fwd / bwd time order)
    whf_ref/whb_ref : (H, 4H)         hidden->gates weights per direction
    of_ref/ob_ref   : (chunk, B, H)   per-step hidden outputs
    state_ref       : (4, B, H)       VMEM scratch: [h_f, c_f, h_b, c_b],
                                      persists across grid steps.
    """
    @pl.when(pl.program_id(0) == 0)
    def _init():
        state_ref[...] = jnp.zeros_like(state_ref)

    whf = whf_ref[...]
    whb = whb_ref[...]

    def cell(gx, m, h, c, w):
        gates = gx + jnp.dot(h, w, preferred_element_type=jnp.float32)  # (B, 4H)
        i_g = jax.nn.sigmoid(gates[:, 0 * hidden:1 * hidden])
        f_g = jax.nn.sigmoid(gates[:, 1 * hidden:2 * hidden])
        g_g = jnp.tanh(gates[:, 2 * hidden:3 * hidden])
        o_g = jax.nn.sigmoid(gates[:, 3 * hidden:4 * hidden])
        c_new = f_g * c + i_g * g_g
        h_new = o_g * jnp.tanh(c_new)
        valid = m != 0.0                          # (B, 1) bool
        return (jnp.where(valid, h_new, h),       # freeze state past length
                jnp.where(valid, c_new, c),
                jnp.where(valid, h_new, 0.0))     # pad_packed zeros

    def body(j, carry):
        hf, cf, hb, cb = carry
        # forward direction: local time j  (global  s*chunk + j)
        hf, cf, yf = cell(gxf_ref[j], mf_ref[j], hf, cf, whf)
        of_ref[j] = yf
        # backward direction: local time chunk-1-j (global T-1 - s*chunk - j)
        jb = chunk - 1 - j
        hb, cb, yb = cell(gxb_ref[jb], mb_ref[jb], hb, cb, whb)
        ob_ref[jb] = yb
        return hf, cf, hb, cb

    carry0 = (state_ref[0], state_ref[1], state_ref[2], state_ref[3])
    hf, cf, hb, cb = lax.fori_loop(0, chunk, body, carry0, unroll=True)
    state_ref[0] = hf
    state_ref[1] = cf
    state_ref[2] = hb
    state_ref[3] = cb


def bilstm_layer(x_tbd, valid_tb1, w_ih_cat, w_hh_f, w_hh_b, b_cat, *,
                 hidden, chunk):
    """One bidirectional LSTM layer. Returns (T, B, 2H)."""
    T, B, D = x_tbd.shape
    H4 = 4 * hidden
    # gxf/gxb blocks slice the last (8H) dim into 4H halves -> needs 4H % 128 == 0.
    assert H4 % 128 == 0, "4*hidden must be a multiple of 128 (lane width)"

    # Hoisted input projection for both directions at once (+ folded bias).
    gates = matmul_bias(x_tbd.reshape(T * B, D), w_ih_cat, b_cat)   # (T*B, 8H)
    gates = gates.reshape(T, B, 2 * H4)

    nchunks = T // chunk
    kernel = functools.partial(_bilstm_chunk_kernel, hidden=hidden, chunk=chunk)
    out_f, out_b = pl.pallas_call(
        kernel,
        out_shape=(jax.ShapeDtypeStruct((T, B, hidden), jnp.float32),
                   jax.ShapeDtypeStruct((T, B, hidden), jnp.float32)),
        grid=(nchunks,),
        in_specs=[
            pl.BlockSpec((chunk, B, H4), lambda s: (s, 0, 0)),                # fwd gates
            pl.BlockSpec((chunk, B, H4), lambda s: (nchunks - 1 - s, 0, 1)),  # bwd gates
            pl.BlockSpec((chunk, B, 1), lambda s: (s, 0, 0)),                 # fwd mask
            pl.BlockSpec((chunk, B, 1), lambda s: (nchunks - 1 - s, 0, 0)),   # bwd mask
            pl.BlockSpec((hidden, H4), lambda s: (0, 0)),                     # W_hh fwd
            pl.BlockSpec((hidden, H4), lambda s: (0, 0)),                     # W_hh bwd
        ],
        out_specs=(
            pl.BlockSpec((chunk, B, hidden), lambda s: (s, 0, 0)),
            pl.BlockSpec((chunk, B, hidden), lambda s: (nchunks - 1 - s, 0, 0)),
        ),
        scratch_shapes=[pltpu.VMEM((4, B, hidden), jnp.float32)],
        compiler_params=pltpu.CompilerParams(
            dimension_semantics=("arbitrary",)),   # recurrence: sequential grid
    )(gates, gates, valid_tb1, valid_tb1, w_hh_f, w_hh_b)

    return jnp.concatenate([out_f, out_b], axis=-1)                # (T, B, 2H)


# ---------------------------------------------------------------------------
# 3) Head: sigmoid(h @ w + b) * mask, lane-dense (T, B) output
# ---------------------------------------------------------------------------
def _head_kernel(x_ref, w_ref, b_ref, m_ref, o_ref):
    # x:(tt,B,2H) * w:(1,1,2H) -> lane reduce -> lane-dense (tt,B) logits.
    logits = jnp.sum(x_ref[...] * w_ref[...], axis=-1) + b_ref[...]
    o_ref[...] = jax.nn.sigmoid(logits) * m_ref[...]


def head(h2_tbh, w_lin, b_lin, mask_tb):
    T, B, H2 = h2_tbh.shape
    tt = _pick_tile(T, 64, 8)
    grid = (T // tt,)
    w3 = w_lin.reshape(1, 1, H2)
    b2 = b_lin.reshape(1, 1)
    return pl.pallas_call(
        _head_kernel,
        out_shape=jax.ShapeDtypeStruct((T, B), jnp.float32),
        grid=grid,
        in_specs=[pl.BlockSpec((tt, B, H2), lambda s: (s, 0, 0)),
                  pl.BlockSpec((1, 1, H2), lambda s: (0, 0, 0)),
                  pl.BlockSpec((1, 1), lambda s: (0, 0)),
                  pl.BlockSpec((tt, B), lambda s: (s, 0))],
        out_specs=pl.BlockSpec((tt, B), lambda s: (s, 0)),
        compiler_params=pltpu.CompilerParams(
            dimension_semantics=("parallel",)),
    )(h2_tbh, w3, b2, mask_tb)


# ---------------------------------------------------------------------------
# Full forward (batch-first I/O like the PyTorch module)
# ---------------------------------------------------------------------------
def bilstm_forward(params, x, input_lengths, mask, embeddings, *, hidden, max_len):
    B, T, _ = x.shape
    assert T == max_len

    # Pad batch to a multiple of 8 (f32 sublane quantum): unmasked (B,H) stores
    # and better MXU row occupancy for the per-step h @ W_hh matmul.
    B_pad = -(-B // 8) * 8
    pad = B_pad - B
    if pad:
        x = jnp.pad(x, ((0, pad), (0, 0), (0, 0)))
        input_lengths = jnp.pad(input_lengths, (0, pad))      # length 0 -> fully masked
        mask = jnp.pad(mask, ((0, pad), (0, 0)))
        embeddings = jnp.pad(embeddings, (0, pad))

    # Embedding lookup + broadcast over time (plain-JAX glue; matches
    # embed -> view(B,E,1) -> repeat(1,1,T) -> transpose(1,2)).
    e = params["embed"][embeddings]                                  # (B_pad, E)
    e_rep = jnp.broadcast_to(e[:, None, :], (B_pad, T, e.shape[-1]))
    xcat = jnp.concatenate([x, e_rep], axis=-1).astype(jnp.float32)
    xt = jnp.transpose(xcat, (1, 0, 2))                              # (T, B_pad, D)

    valid = (jnp.arange(T)[:, None] < input_lengths[None, :])
    valid3 = valid.astype(jnp.float32)[..., None]                    # (T, B_pad, 1)

    chunk = _pick_tile(T, 16, 1)   # timesteps streamed per grid step

    def run_layer(inp, layer):
        w_ih_cat = jnp.concatenate(
            [params[f"w_ih_l{layer}"], params[f"w_ih_l{layer}_rev"]], axis=1)  # (D, 8H)
        b_cat = jnp.concatenate(
            [params[f"b_l{layer}"], params[f"b_l{layer}_rev"]], axis=1)        # (1, 8H)
        return bilstm_layer(inp, valid3, w_ih_cat,
                            params[f"w_hh_l{layer}"], params[f"w_hh_l{layer}_rev"],
                            b_cat, hidden=hidden, chunk=chunk)

    h1 = run_layer(xt, 0)        # (T, B_pad, 2H)
    h2 = run_layer(h1, 1)        # (T, B_pad, 2H)

    mask_tb = jnp.transpose(mask.astype(jnp.float32), (1, 0))        # (T, B_pad)
    out_tb = head(h2, params["w_lin"], params["b_lin"], mask_tb)     # (T, B_pad)
    return jnp.transpose(out_tb, (1, 0))[:B]                         # (B, T)


# ---------------------------------------------------------------------------
# Deterministic parameter init (PyTorch LSTM-style uniform(-k, k), k=1/sqrt(H))
# ---------------------------------------------------------------------------
def init_params(key, *, in_feat, embedd_size, hidden, vocab=1000):
    k = 1.0 / jnp.sqrt(jnp.float32(hidden))
    params = {}
    key, sub = jax.random.split(key)
    params["embed"] = jax.random.normal(sub, (vocab, embedd_size), jnp.float32)

    def uni(key, shape):
        return jax.random.uniform(key, shape, jnp.float32, -k, k)

    d0 = in_feat + embedd_size        # layer-0 input size
    d1 = 2 * hidden                   # layer-1 input size (bidirectional concat)
    for layer, din in ((0, d0), (1, d1)):
        for suffix in ("", "_rev"):
            key, k1, k2, k3, k4 = jax.random.split(key, 5)
            params[f"w_ih_l{layer}{suffix}"] = uni(k1, (din, 4 * hidden))
            params[f"w_hh_l{layer}{suffix}"] = uni(k2, (hidden, 4 * hidden))
            # combined b_ih + b_hh
            params[f"b_l{layer}{suffix}"] = uni(k3, (1, 4 * hidden)) + uni(k4, (1, 4 * hidden))

    key, k1, k2 = jax.random.split(key, 3)
    params["w_lin"] = uni(k1, (2 * hidden, 1))
    params["b_lin"] = uni(k2, (1, 1))
    return params


# ---------------------------------------------------------------------------
if __name__ == "__main__":
    # Small shapes consistent with the module's forward pass.
    B = 2          # batch
    T = 8          # max_len / sequence length (module uses 300)
    IN_FEAT = 16   # per-step feature dim (module uses 1152)
    EMB = 8        # embedding size (module uses 32)
    HID = 32       # hidden size (module uses 256)

    key = jax.random.PRNGKey(0)
    key, kx = jax.random.split(key)
    params = init_params(key, in_feat=IN_FEAT, embedd_size=EMB, hidden=HID)

    x = jax.random.normal(kx, (B, T, IN_FEAT), jnp.float32)
    input_lengths = jnp.array([8, 5], dtype=jnp.int32)            # sorted desc (pack_padded)
    mask = (jnp.arange(T)[None, :] < input_lengths[:, None]).astype(jnp.float32)  # (B, T)
    embeddings = jnp.array([3, 7], dtype=jnp.int32)               # (B,)

    out = bilstm_forward(params, x, input_lengths, mask, embeddings,
                         hidden=HID, max_len=T)
    out = jax.block_until_ready(out)
    assert out.shape == (B, T)
    assert bool(jnp.all(jnp.isfinite(out)))
    print("KERNEL_OK")
</pallas_src>

<mosaic_0001>
module attributes {stable_mosaic.version = 11 : i64} {
  func.func @_matmul_bias_kernel(%arg0: i32, %arg1: i32, %arg2: i32, %arg3: memref<64x24xf32, #tpu.memory_space<vmem>>, %arg4: memref<24x256xf32, #tpu.memory_space<vmem>>, %arg5: memref<1x256xf32, #tpu.memory_space<vmem>>, %arg6: memref<64x256xf32, #tpu.memory_space<vmem>>, %arg7: memref<64x256xf32, #tpu.memory_space<vmem>>) attributes {dimension_semantics = [#tpu.dimension_semantics<parallel>, #tpu.dimension_semantics<parallel>, #tpu.dimension_semantics<arbitrary>], iteration_bounds = array<i64: 1, 1, 1>, scalar_prefetch = 0 : i64, scratch_operands = 1 : i64, tpu.core_type = #tpu.core_type<tc>, window_params = [{transform_indices = @transform_0, window_bounds = array<i64: 64, 24>}, {transform_indices = @transform_1, window_bounds = array<i64: 24, 256>}, {transform_indices = @transform_2, window_bounds = array<i64: 1, 256>}, {transform_indices = @transform_3, window_bounds = array<i64: 64, 256>}]} {
    %c0_i32 = arith.constant 0 : i32
    %0 = arith.cmpi eq, %arg2, %c0_i32 : i32
    %1 = arith.extui %0 : i1 to i32
    %c0_i32_0 = arith.constant 0 : i32
    %2 = arith.cmpi ne, %1, %c0_i32_0 : i32
    scf.if %2 {
      %cst_10 = arith.constant 0.000000e+00 : f32
      %12 = vector.broadcast %cst_10 : f32 to vector<64x256xf32>
      %c0_11 = arith.constant 0 : index
      %c0_12 = arith.constant 0 : index
      %13 = vector.load %arg7[%c0_11, %c0_12] : memref<64x256xf32, #tpu.memory_space<vmem>>, vector<64x256xf32>
      tpu.vector_store %arg7[%c0_11, %c0_12], %12 {strides = array<i32>} : memref<64x256xf32, #tpu.memory_space<vmem>>, vector<64x256xf32>,
    } else {
    }
    %c0 = arith.constant 0 : index
    %c0_1 = arith.constant 0 : index
    %3 = vector.load %arg7[%c0, %c0_1] : memref<64x256xf32, #tpu.memory_space<vmem>>, vector<64x256xf32>
    %c0_2 = arith.constant 0 : index
    %c0_3 = arith.constant 0 : index
    %4 = vector.load %arg3[%c0_2, %c0_3] : memref<64x24xf32, #tpu.memory_space<vmem>>, vector<64x24xf32>
    %c0_4 = arith.constant 0 : index
    %c0_5 = arith.constant 0 : index
    %5 = vector.load %arg4[%c0_4, %c0_5] : memref<24x256xf32, #tpu.memory_space<vmem>>, vector<24x256xf32>
    %cst = arith.constant dense<0.000000e+00> : vector<64x256xf32>
    %6 = tpu.matmul %4, %5, %cst {dimension_numbers = #tpu.dot_dimension_numbers<[1], [0], [0], [1], [0, 0, 1, 1], [], []>} : vector<64x24xf32>, vector<24x256xf32>, vector<64x256xf32> -> vector<64x256xf32>
    %7 = arith.addf %3, %6 : vector<64x256xf32>
    %c0_6 = arith.constant 0 : index
    %c0_7 = arith.constant 0 : index
    %8 = vector.load %arg7[%c0_6, %c0_7] : memref<64x256xf32, #tpu.memory_space<vmem>>, vector<64x256xf32>
    tpu.vector_store %arg7[%c0_6, %c0_7], %7 {strides = array<i32>} : memref<64x256xf32, #tpu.memory_space<vmem>>, vector<64x256xf32>,
    %c0_i32_8 = arith.constant 0 : i32
    %9 = arith.cmpi eq, %arg2, %c0_i32_8 : i32
    %10 = arith.extui %9 : i1 to i32
    %c0_i32_9 = arith.constant 0 : i32
    %11 = arith.cmpi ne, %10, %c0_i32_9 : i32
    scf.if %11 {
      %c0_10 = arith.constant 0 : index
      %c0_11 = arith.constant 0 : index
      %12 = vector.load %arg7[%c0_10, %c0_11] : memref<64x256xf32, #tpu.memory_space<vmem>>, vector<64x256xf32>
      %c0_12 = arith.constant 0 : index
      %c0_13 = arith.constant 0 : index
      %13 = vector.load %arg5[%c0_12, %c0_13] : memref<1x256xf32, #tpu.memory_space<vmem>>, vector<1x256xf32>
      %14 = vector.broadcast %13 : vector<1x256xf32> to vector<64x256xf32>
      %15 = arith.addf %12, %14 : vector<64x256xf32>
      %c0_14 = arith.constant 0 : index
      %c0_15 = arith.constant 0 : index
      %16 = vector.load %arg6[%c0_14, %c0_15] : memref<64x256xf32, #tpu.memory_space<vmem>>, vector<64x256xf32>
      tpu.vector_store %arg6[%c0_14, %c0_15], %15 {strides = array<i32>} : memref<64x256xf32, #tpu.memory_space<vmem>>, vector<64x256xf32>,
    } else {
    }
    return
  }
  func.func @transform_0(%arg0: i32, %arg1: i32, %arg2: i32) -> (i32, i32) {
    %c0_i32 = arith.constant 0 : i32
    return %arg0, %arg2 : i32, i32
  }
  func.func @transform_1(%arg0: i32, %arg1: i32, %arg2: i32) -> (i32, i32) {
    %c0_i32 = arith.constant 0 : i32
    return %arg2, %arg1 : i32, i32
  }
  func.func @transform_2(%arg0: i32, %arg1: i32, %arg2: i32) -> (i32, i32) {
    %c0_i32 = arith.constant 0 : i32
    %c0_i32_0 = arith.constant 0 : i32
    return %c0_i32, %arg1 : i32, i32
  }
  func.func @transform_3(%arg0: i32, %arg1: i32, %arg2: i32) -> (i32, i32) {
    %c0_i32 = arith.constant 0 : i32
    return %arg0, %arg1 : i32, i32
  }
}

</mosaic_0001>

<llo_original>
// kernel: tpu_custom_call.1
$region0: #{tpu_custom_call.1}
  #allocation0 [shape = 'u32[]', space=smem, size = 0x4, offset = 0x4, fixed_abs, tag = 'smem constant byte address 0x4 - core index']
  #allocation1 [shape = 'u32[72,128]{1,0:T(1,128)}', space=vmem, size = 0x9000, scoped, tag = 'internal scratch']
  #allocation2 [shape = 'f32[64,256]{1,0:T(8,128)}', space=vmem, size = 0x10000, scoped, tag = 'scratch operand']
  %s0 = inlined_call_operand.vmem [shape: f32[64,24], index: 0, kind: input, shape index: {}]
  %s1 = inlined_call_operand.vmem [shape: f32[24,256], index: 1, kind: input, shape index: {}]
  %s2 = inlined_call_operand.vmem [shape: f32[1,256], index: 2, kind: input, shape index: {}]
  %s3 = inlined_call_operand.hbm [shape: f32[64,256], index: 3, kind: output, shape index: {}]
  %s4 = sld [smem:[#allocation0]]
  $region30: #{tpu_custom_call.1} parent=0
    _
  %s6 = ssub.s32 1, %s4
  %s7 = scalar_select 0, %s6, %s4
  $region1: #{tpu_custom_call.1} parent=0
    #allocation3 [shape = 'u8[65536]{0}', space=vmem, size = 0x10000, scoped, tag = 'output window, operand 0, single buffered']
    #allocation4 [shape = 's32[1]{0}', space=sflag, size = 0x4, scoped, tag = 'scoped memory for tpu_custom_call.1']
    %8 = vsyncpa [#allocation4], 0
    // Predicated region
    $region2: #{tpu_custom_call.1} parent=1 // pred_check
      _
    $region3: #{tpu_custom_call.1} parent=1 // pred_check_branch
      %10 = sbr.rel (0) target = $region5
    $region4: #{tpu_custom_call.1} parent=1 // pred_region
      _
    $region5: #{tpu_custom_call.1} parent=1 // pred_fallthru
      _
    // Predicated region
    $region6: #{tpu_custom_call.1} parent=1 // pred_check
      _
    $region7: #{tpu_custom_call.1} parent=1 // pred_check_branch
      %12 = sbr.rel (0) target = $region9
    $region8: #{tpu_custom_call.1} parent=1 // pred_region
      _
    $region9: #{tpu_custom_call.1} parent=1 // pred_fallthru
      _
    // Predicated region
    $region10: #{tpu_custom_call.1} parent=1 // pred_check
      _
    $region11: #{tpu_custom_call.1} parent=1 // pred_check_branch
      %14 = sbr.rel (0) target = $region13
    $region12: #{tpu_custom_call.1} parent=1 // pred_region
      _
    $region13: #{tpu_custom_call.1} parent=1 // pred_fallthru
      _
    %p15 = scmp.eq.s32.totalorder 0, 0
    // Predicated region
    $region14: #{tpu_custom_call.1} parent=1 // pred_check
      %p16 = pneg %p15
    $region15: #{tpu_custom_call.1} parent=1 // pred_check_branch
      %18 = sbr.rel (%p16) target = $region17
    $region16: #{tpu_custom_call.1} parent=1 // pred_region
      %19 = vst [vmem:[#allocation2] sm:$0xff] 0.0
      %20 = vst [vmem:[#allocation2 + $0x8] sm:$0xff] 0.0
      %21 = vst [vmem:[#allocation2 + $0x10] sm:$0xff] 0.0
      %22 = vst [vmem:[#allocation2 + $0x18] sm:$0xff] 0.0
      %23 = vst [vmem:[#allocation2 + $0x20] sm:$0xff] 0.0
      %24 = vst [vmem:[#allocation2 + $0x28] sm:$0xff] 0.0
      %25 = vst [vmem:[#allocation2 + $0x30] sm:$0xff] 0.0
      %26 = vst [vmem:[#allocation2 + $0x38] sm:$0xff] 0.0
      %27 = vst [vmem:[#allocation2 + $0x40] sm:$0xff] 0.0
      %28 = vst [vmem:[#allocation2 + $0x48] sm:$0xff] 0.0
      %29 = vst [vmem:[#allocation2 + $0x50] sm:$0xff] 0.0
      %30 = vst [vmem:[#allocation2 + $0x58] sm:$0xff] 0.0
      %31 = vst [vmem:[#allocation2 + $0x60] sm:$0xff] 0.0
      %32 = vst [vmem:[#allocation2 + $0x68] sm:$0xff] 0.0
      %33 = vst [vmem:[#allocation2 + $0x70] sm:$0xff] 0.0
      %34 = vst [vmem:[#allocation2 + $0x78] sm:$0xff] 0.0
    $region17: #{tpu_custom_call.1} parent=1 // pred_fallthru
      _
    %v35 = vld [vmem:[#allocation2] sm:$0xff]
    %v36 = vld [vmem:[#allocation2 + $0x8] sm:$0xff]
    %v37 = vld [vmem:[#allocation2 + $0x10] sm:$0xff]
    %v38 = vld [vmem:[#allocation2 + $0x18] sm:$0xff]
    %v39 = vld [vmem:[#allocation2 + $0x20] sm:$0xff]
    %v40 = vld [vmem:[#allocation2 + $0x28] sm:$0xff]
    %v41 = vld [vmem:[#allocation2 + $0x30] sm:$0xff]
    %v42 = vld [vmem:[#allocation2 + $0x38] sm:$0xff]
    %v43 = vld [vmem:[#allocation2 + $0x40] sm:$0xff]
    %v44 = vld [vmem:[#allocation2 + $0x48] sm:$0xff]
    %v45 = vld [vmem:[#allocation2 + $0x50] sm:$0xff]
    %v46 = vld [vmem:[#allocation2 + $0x58] sm:$0xff]
    %v47 = vld [vmem:[#allocation2 + $0x60] sm:$0xff]
    %v48 = vld [vmem:[#allocation2 + $0x68] sm:$0xff]
    %v49 = vld [vmem:[#allocation2 + $0x70] sm:$0xff]
    %v50 = vld [vmem:[#allocation2 + $0x78] sm:$0xff]
    %v51 = vld [vmem:[%s0] sm:$0xff]
    %v52 = vld [vmem:[%s0 + $0x8] sm:$0xff]
    %v53 = vld [vmem:[%s0 + $0x10] sm:$0xff]
    %v54 = vld [vmem:[%s0 + $0x18] sm:$0xff]
    %v55 = vld [vmem:[%s0 + $0x20] sm:$0xff]
    %v56 = vld [vmem:[%s0 + $0x28] sm:$0xff]
    %v57 = vld [vmem:[%s0 + $0x30] sm:$0xff]
    %v58 = vld [vmem:[%s0 + $0x38] sm:$0xff]
    %v59 = vld [vmem:[%s1] sm:$0xff]
    %v60 = vld [vmem:[%s1 + $0x8] sm:$0xff]
    %v61 = vld [vmem:[%s1 + $0x10] sm:$0xff]
    %v62 = vld [vmem:[%s1 + $0x18] sm:$0xff]
    %v63 = vld [vmem:[%s1 + $0x20] sm:$0xff]
    %v64 = vld [vmem:[%s1 + $0x28] sm:$0xff]
    %vm65 = vcmask 195584
    %v67 = vsel %vm65, %v51, 0
    %v70 = vsel %vm65, %v52, 0
    %v73 = vsel %vm65, %v53, 0
    %v76 = vsel %vm65, %v54, 0
    %v79 = vsel %vm65, %v55, 0
    %v82 = vsel %vm65, %v56, 0
    %v85 = vsel %vm65, %v57, 0
    %v88 = vsel %vm65, %v58, 0
    %90 = vmatpush.msra.mxu0 0.0
    %91 = vmatpush.msra.mxu0 0.0
    %92 = vmatpush.msra.mxu0 0.0
    %93 = vmatpush.msra.mxu0 0.0
    %94 = vmatpush.msra.mxu0 0.0
    %95 = vmatpush.msra.mxu0 0.0
    %96 = vmatpush.msra.mxu0 0.0
    %97 = vmatpush.msra.mxu0 0.0
    %98 = vmatpush.msra.mxu0 0.0
    %99 = vmatpush.msra.mxu0 0.0
    %100 = vmatpush.msra.mxu0 0.0
    %101 = vmatpush.msra.mxu0 0.0
    %102 = vmatpush.msra.mxu0 0.0
    %103 = vmatpush.msra.mxu0 %v63
    %104 = vmatpush.msra.mxu0 %v61
    %105 = vmatpush.msra.mxu0 %v59
    %106 = vmatmul.f32.gmra.mxu0 %v67
    %v107 = vpop.f32.mrf.mxu0
    %v108 = vadd.f32 0.0, %v107
    %109 = vmatmul.f32.gmra.mxu0 %v70
    %v110 = vpop.f32.mrf.mxu0
    %v111 = vadd.f32 0.0, %v110
    %112 = vmatmul.f32.gmra.mxu0 %v73
    %v113 = vpop.f32.mrf.mxu0
    %v114 = vadd.f32 0.0, %v113
    %115 = vmatmul.f32.gmra.mxu0 %v76
    %v116 = vpop.f32.mrf.mxu0
    %v117 = vadd.f32 0.0, %v116
    %118 = vmatmul.f32.gmra.mxu0 %v79
    %v119 = vpop.f32.mrf.mxu0
    %v120 = vadd.f32 0.0, %v119
    %121 = vmatmul.f32.gmra.mxu0 %v82
    %v122 = vpop.f32.mrf.mxu0
    %v123 = vadd.f32 0.0, %v122
    %124 = vmatmul.f32.gmra.mxu0 %v85
    %v125 = vpop.f32.mrf.mxu0
    %v126 = vadd.f32 0.0, %v125
    %127 = vmatmul.f32.gmra.mxu0 %v88
    %v128 = vpop.f32.mrf.mxu0
    %v129 = vadd.f32 0.0, %v128
    %130 = vdwg.mxu0
    %131 = vmatpush.msra.mxu0 0.0
    %132 = vmatpush.msra.mxu0 0.0
    %133 = vmatpush.msra.mxu0 0.0
    %134 = vmatpush.msra.mxu0 0.0
    %135 = vmatpush.msra.mxu0 0.0
    %136 = vmatpush.msra.mxu0 0.0
    %137 = vmatpush.msra.mxu0 0.0
    %138 = vmatpush.msra.mxu0 0.0
    %139 = vmatpush.msra.mxu0 0.0
    %140 = vmatpush.msra.mxu0 0.0
    %141 = vmatpush.msra.mxu0 0.0
    %142 = vmatpush.msra.mxu0 0.0
    %143 = vmatpush.msra.mxu0 0.0
    %144 = vmatpush.msra.mxu0 %v64
    %145 = vmatpush.msra.mxu0 %v62
    %146 = vmatpush.msra.mxu0 %v60
    %147 = vmatmul.f32.gmra.mxu0 %v67
    %v148 = vpop.f32.mrf.mxu0
    %v149 = vadd.f32 0.0, %v148
    %150 = vmatmul.f32.gmra.mxu0 %v70
    %v151 = vpop.f32.mrf.mxu0
    %v152 = vadd.f32 0.0, %v151
    %153 = vmatmul.f32.gmra.mxu0 %v73
    %v154 = vpop.f32.mrf.mxu0
    %v155 = vadd.f32 0.0, %v154
    %156 = vmatmul.f32.gmra.mxu0 %v76
    %v157 = vpop.f32.mrf.mxu0
    %v158 = vadd.f32 0.0, %v157
    %159 = vmatmul.f32.gmra.mxu0 %v79
    %v160 = vpop.f32.mrf.mxu0
    %v161 = vadd.f32 0.0, %v160
    %162 = vmatmul.f32.gmra.mxu0 %v82
    %v163 = vpop.f32.mrf.mxu0
    %v164 = vadd.f32 0.0, %v163
    %165 = vmatmul.f32.gmra.mxu0 %v85
    %v166 = vpop.f32.mrf.mxu0
    %v167 = vadd.f32 0.0, %v166
    %168 = vmatmul.f32.gmra.mxu0 %v88
    %v169 = vpop.f32.mrf.mxu0
    %v170 = vadd.f32 0.0, %v169
    %171 = vdwg.mxu0
    %v172 = vadd.f32 %v35, %v108
    %v173 = vadd.f32 %v36, %v149
    %v174 = vadd.f32 %v37, %v111
    %v175 = vadd.f32 %v38, %v152
    %v176 = vadd.f32 %v39, %v114
    %v177 = vadd.f32 %v40, %v155
    %v178 = vadd.f32 %v41, %v117
    %v179 = vadd.f32 %v42, %v158
    %v180 = vadd.f32 %v43, %v120
    %v181 = vadd.f32 %v44, %v161
    %v182 = vadd.f32 %v45, %v123
    %v183 = vadd.f32 %v46, %v164
    %v184 = vadd.f32 %v47, %v126
    %v185 = vadd.f32 %v48, %v167
    %v186 = vadd.f32 %v49, %v129
    %v187 = vadd.f32 %v50, %v170
    %188 = vst [vmem:[#allocation2] sm:$0xff] %v172
    %189 = vst [vmem:[#allocation2 + $0x8] sm:$0xff] %v173
    %190 = vst [vmem:[#allocation2 + $0x10] sm:$0xff] %v174
    %191 = vst [vmem:[#allocation2 + $0x18] sm:$0xff] %v175
    %192 = vst [vmem:[#allocation2 + $0x20] sm:$0xff] %v176
    %193 = vst [vmem:[#allocation2 + $0x28] sm:$0xff] %v177
    %194 = vst [vmem:[#allocation2 + $0x30] sm:$0xff] %v178
    %195 = vst [vmem:[#allocation2 + $0x38] sm:$0xff] %v179
    %196 = vst [vmem:[#allocation2 + $0x40] sm:$0xff] %v180
    %197 = vst [vmem:[#allocation2 + $0x48] sm:$0xff] %v181
    %198 = vst [vmem:[#allocation2 + $0x50] sm:$0xff] %v182
    %199 = vst [vmem:[#allocation2 + $0x58] sm:$0xff] %v183
    %200 = vst [vmem:[#allocation2 + $0x60] sm:$0xff] %v184
    %201 = vst [vmem:[#allocation2 + $0x68] sm:$0xff] %v185
    %202 = vst [vmem:[#allocation2 + $0x70] sm:$0xff] %v186
    %203 = vst [vmem:[#allocation2 + $0x78] sm:$0xff] %v187
    // Predicated region
    $region18: #{tpu_custom_call.1} parent=1 // pred_check
      %p204 = pneg %p15
    $region19: #{tpu_custom_call.1} parent=1 // pred_check_branch
      %206 = sbr.rel (%p204) target = $region21
    $region20: #{tpu_custom_call.1} parent=1 // pred_region
      %v207 = vld [vmem:[#allocation2] sm:$0xff]
      %v208 = vld [vmem:[#allocation2 + $0x8] sm:$0xff]
      %v209 = vld [vmem:[#allocation2 + $0x10] sm:$0xff]
      %v210 = vld [vmem:[#allocation2 + $0x18] sm:$0xff]
      %v211 = vld [vmem:[#allocation2 + $0x20] sm:$0xff]
      %v212 = vld [vmem:[#allocation2 + $0x28] sm:$0xff]
      %v213 = vld [vmem:[#allocation2 + $0x30] sm:$0xff]
      %v214 = vld [vmem:[#allocation2 + $0x38] sm:$0xff]
      %v215 = vld [vmem:[#allocation2 + $0x40] sm:$0xff]
      %v216 = vld [vmem:[#allocation2 + $0x48] sm:$0xff]
      %v217 = vld [vmem:[#allocation2 + $0x50] sm:$0xff]
      %v218 = vld [vmem:[#allocation2 + $0x58] sm:$0xff]
      %v219 = vld [vmem:[#allocation2 + $0x60] sm:$0xff]
      %v220 = vld [vmem:[#allocation2 + $0x68] sm:$0xff]
      %v221 = vld [vmem:[#allocation2 + $0x70] sm:$0xff]
      %v222 = vld [vmem:[#allocation2 + $0x78] sm:$0xff]
      %v223 = vld [vmem:[%s2] sm:$0x3]
      %v225 = vperm.slane %v223, 0
      %v226 = vperm.slane %v223, 1
      %v229 = vadd.f32 %v207, %v225
      %v230 = vadd.f32 %v208, %v226
      %v231 = vadd.f32 %v209, %v225
      %v232 = vadd.f32 %v210, %v226
      %v233 = vadd.f32 %v211, %v225
      %v234 = vadd.f32 %v212, %v226
      %v235 = vadd.f32 %v213, %v225
      %v236 = vadd.f32 %v214, %v226
      %v237 = vadd.f32 %v215, %v225
      %v238 = vadd.f32 %v216, %v226
      %v239 = vadd.f32 %v217, %v225
      %v240 = vadd.f32 %v218, %v226
      %v241 = vadd.f32 %v219, %v225
      %v242 = vadd.f32 %v220, %v226
      %v243 = vadd.f32 %v221, %v225
      %v244 = vadd.f32 %v222, %v226
      %245 = vst [vmem:[#allocation3] sm:$0xff] %v229
      %246 = vst [vmem:[#allocation3 + $0x8] sm:$0xff] %v230
      %247 = vst [vmem:[#allocation3 + $0x10] sm:$0xff] %v231
      %248 = vst [vmem:[#allocation3 + $0x18] sm:$0xff] %v232
      %249 = vst [vmem:[#allocation3 + $0x20] sm:$0xff] %v233
      %250 = vst [vmem:[#allocation3 + $0x28] sm:$0xff] %v234
      %251 = vst [vmem:[#allocation3 + $0x30] sm:$0xff] %v235
      %252 = vst [vmem:[#allocation3 + $0x38] sm:$0xff] %v236
      %253 = vst [vmem:[#allocation3 + $0x40] sm:$0xff] %v237
      %254 = vst [vmem:[#allocation3 + $0x48] sm:$0xff] %v238
      %255 = vst [vmem:[#allocation3 + $0x50] sm:$0xff] %v239
      %256 = vst [vmem:[#allocation3 + $0x58] sm:$0xff] %v240
      %257 = vst [vmem:[#allocation3 + $0x60] sm:$0xff] %v241
      %258 = vst [vmem:[#allocation3 + $0x68] sm:$0xff] %v242
      %259 = vst [vmem:[#allocation3 + $0x70] sm:$0xff] %v243
      %260 = vst [vmem:[#allocation3 + $0x78] sm:$0xff] %v244
    $region21: #{tpu_custom_call.1} parent=1 // pred_fallthru
      _
    // Predicated region
    $region22: #{tpu_custom_call.1} parent=1 // pred_check
      _
    $region23: #{tpu_custom_call.1} parent=1 // pred_check_branch
      %262 = sbr.rel (0) target = $region25
    $region24: #{tpu_custom_call.1} parent=1 // pred_region
      %264 = vsyncadd [#allocation4], 0
      %s265 = sshll.u32 [#allocation3], 4
      %s266 = int_to_ptr.vmem [resolvable:$true] %s265
      %s267 = sshll.u32 %s3, 4
      %s268 = int_to_ptr.hbm [resolvable:$true] %s267
      %273 = dma.vmem_to_hbm [thread:$0]  %s266, 2048, %s268, [#allocation4], 256, 256, 16
    $region25: #{tpu_custom_call.1} parent=1 // pred_fallthru
      _
    // Predicated region
    $region26: #{tpu_custom_call.1} parent=1 // pred_check
      _
    $region27: #{tpu_custom_call.1} parent=1 // pred_check_branch
      %275 = sbr.rel (0) target = $region29
    $region28: #{tpu_custom_call.1} parent=1 // pred_region
      %277 = dma.done [#allocation4], 2048
    $region29: #{tpu_custom_call.1} parent=1 // pred_fallthru
      _
    %278 = vsyncpa [#allocation4], 1

</llo_original>
